<compile_context>
chip_gen: v7x
topology: tpu7x:2x2x1
jax: 0.10.0
libtpu: 0.0.40
codegen_flags: <defaults>
</compile_context>

<pallas_src>
import jax
import jax.numpy as jnp
from jax.experimental import pallas as pl
from jax.experimental.pallas import tpu as pltpu


# ------------------------- Pallas kernel -------------------------

def _proj_kernel(x_ref, w_ref, b_ref, o_ref):
    # x: (tm, K)  w: (K, N)  b: (1, N)  o: (tm, N)
    o_ref[...] = (
        jnp.dot(x_ref[...], w_ref[...], preferred_element_type=jnp.float32)
        + b_ref[...]
    ).astype(o_ref.dtype)


# ------------------------- Wrapper -------------------------

def _round_up(x, m):
    return ((x + m - 1) // m) * m


def visual_projection(
    visual_features,
    w,
    b,
    *,
    tm=512,
    compute_dtype=None,
    xla_fallback_rows=0,
):
    """VisualProjection forward.

    visual_features: (B, S, visual_dim) float32
    w:               (visual_dim, dim)   == conv1d.weight[:, :, 0].T
    b:               (dim,)              == conv1d.bias
    compute_dtype:   dtype fed to the MXU (None -> input dtype; jnp.bfloat16 halves
                     HBM traffic for x, accumulation stays f32).
    returns:         (B, S, dim) in the input dtype
    """
    B, S, K = visual_features.shape
    N = w.shape[1]
    M = B * S
    out_dtype = visual_features.dtype

    x = visual_features.reshape(M, K)
    if compute_dtype is not None:
        x = x.astype(compute_dtype)
        w = w.astype(compute_dtype)
    b2 = b.reshape(1, N).astype(jnp.float32)

    # Small-shape fallback (perf review): at a handful of rows the pallas_call
    # overhead dominates; a plain XLA dot is faster.
    if M < xla_fallback_rows:
        y = (jnp.dot(x, w, preferred_element_type=jnp.float32) + b2).astype(out_dtype)
        return y.reshape(B, S, N)

    x_bytes = jnp.dtype(x.dtype).itemsize
    w_bytes = jnp.dtype(w.dtype).itemsize
    o_bytes = jnp.dtype(out_dtype).itemsize

    # Sublane alignment: 8 for 32-bit, 16 for bf16/fp16 tiles.
    align = 16 if x_bytes == 2 else 8

    # Resident weight + bias (conservatively assume double-buffered copies).
    w_resident = 2 * (K * N * w_bytes + N * 4)

    # Per-core VMEM budget (v7x-safe: 64 MiB physical, keep well under 32 MiB scoped).
    budget = 28 << 20
    if w_resident > int(0.8 * budget):
        # Weight too large to keep resident — fall back to plain XLA for correctness.
        # TODO(synk): add a K-tiled accumulator variant for very large projection weights.
        y = (jnp.dot(x, w, preferred_element_type=jnp.float32) + b2).astype(out_dtype)
        return y.reshape(B, S, N)

    # Pick tm: as large as the budget allows (fewer grid steps -> closer to the HBM
    # roofline), but never larger than needed for M and always (align)-multiple.
    tm = min(tm, _round_up(M, align))
    tm = _round_up(tm, align)

    def vmem_needed(t):
        # double-buffered x tile + double-buffered out tile + resident W/bias + slack
        return 2 * t * K * x_bytes + 2 * t * N * o_bytes + w_resident + (1 << 20)

    while tm > align and vmem_needed(tm) > budget:
        tm = _round_up(max(align, tm // 2), align)

    grid_m = pl.cdiv(M, tm)
    grid = (grid_m,)

    cost = pl.CostEstimate(
        flops=2 * M * K * N,
        transcendentals=0,
        # Resident-W variant: every operand is read from HBM exactly once.
        bytes_accessed=M * K * x_bytes + K * N * w_bytes + N * 4 + M * N * o_bytes,
    )

    out = pl.pallas_call(
        _proj_kernel,
        out_shape=jax.ShapeDtypeStruct((M, N), out_dtype),
        grid=grid,
        in_specs=[
            pl.BlockSpec((tm, K), lambda i: (i, 0)),   # streamed activation rows
            pl.BlockSpec((K, N), lambda i: (0, 0)),    # resident weight (fetched once)
            pl.BlockSpec((1, N), lambda i: (0, 0)),    # resident bias
        ],
        out_specs=pl.BlockSpec((tm, N), lambda i: (i, 0)),
        compiler_params=pltpu.CompilerParams(
            dimension_semantics=("parallel",),
            vmem_limit_bytes=int(min(vmem_needed(tm) + (2 << 20), 100 << 20)),
        ),
        cost_estimate=cost,
    )(x, w, b2)

    return out.reshape(B, S, N)


# ------------------------- Pure-JAX reference -------------------------

def reference(visual_features, w, b):
    B, S, K = visual_features.shape
    N = w.shape[1]
    y = visual_features.reshape(B * S, K) @ w + b
    return y.reshape(B, S, N)


# ------------------------- main -------------------------

if __name__ == "__main__":
    # Small shapes consistent with the module: batch=2, seq=8,
    # visual_dim=256 (input feature dim), dim=128 (projection dim).
    B, S, VDIM, DIM = 2, 8, 256, 128

    key = jax.random.PRNGKey(0)
    k_x, k_w, k_b = jax.random.split(key, 3)

    visual_features = jax.random.normal(k_x, (B, S, VDIM), dtype=jnp.float32)
    # Conv1d(kernel_size=1) weight (DIM, VDIM, 1) -> matmul weight (VDIM, DIM)
    w = (0.02 * jax.random.normal(k_w, (VDIM, DIM))).astype(jnp.float32)
    b = (0.02 * jax.random.normal(k_b, (DIM,))).astype(jnp.float32)

    ref = reference(visual_features, w, b)

    # f32 path (exact vs reference). xla_fallback_rows=0 forces the Pallas path
    # even at this tiny demo shape.
    out = visual_projection(visual_features, w, b, xla_fallback_rows=0)
    out = jax.block_until_ready(out)
    assert out.shape == (B, S, DIM)
    assert jnp.allclose(out, ref, atol=1e-5, rtol=1e-5), "f32 mismatch vs reference"

    # bf16 MXU-feed path (f32 accumulation) — looser tolerance per reduced precision.
    out_bf16 = visual_projection(
        visual_features, w, b, compute_dtype=jnp.bfloat16, xla_fallback_rows=0
    )
    out_bf16 = jax.block_until_ready(out_bf16)
    assert jnp.allclose(out_bf16, ref, atol=2e-2, rtol=2e-2), "bf16 mismatch vs reference"

    print("KERNEL_OK")
</pallas_src>

<mosaic_0001>
module attributes {stable_mosaic.version = 11 : i64} {
  func.func @_proj_kernel(%arg0: i32, %arg1: memref<16x256xf32, #tpu.memory_space<vmem>>, %arg2: memref<256x128xf32, #tpu.memory_space<vmem>>, %arg3: memref<1x128xf32, #tpu.memory_space<vmem>>, %arg4: memref<16x128xf32, #tpu.memory_space<vmem>>) attributes {dimension_semantics = [#tpu.dimension_semantics<parallel>], iteration_bounds = array<i64: 1>, scalar_prefetch = 0 : i64, scratch_operands = 0 : i64, tpu.core_type = #tpu.core_type<tc>, window_params = [{transform_indices = @transform_0, window_bounds = array<i64: 16, 256>}, {pipeline_mode = #tpu.pipeline_mode<synchronous>, transform_indices = @transform_1, window_bounds = array<i64: 256, 128>}, {pipeline_mode = #tpu.pipeline_mode<synchronous>, transform_indices = @transform_2, window_bounds = array<i64: 1, 128>}, {transform_indices = @transform_3, window_bounds = array<i64: 16, 128>}]} {
    %c0 = arith.constant 0 : index
    %c0_0 = arith.constant 0 : index
    %0 = vector.load %arg1[%c0, %c0_0] : memref<16x256xf32, #tpu.memory_space<vmem>>, vector<16x256xf32>
    %c0_1 = arith.constant 0 : index
    %c0_2 = arith.constant 0 : index
    %1 = vector.load %arg2[%c0_1, %c0_2] : memref<256x128xf32, #tpu.memory_space<vmem>>, vector<256x128xf32>
    %cst = arith.constant dense<0.000000e+00> : vector<16x128xf32>
    %2 = tpu.matmul %0, %1, %cst {dimension_numbers = #tpu.dot_dimension_numbers<[1], [0], [0], [1], [0, 0, 1, 1], [], []>} : vector<16x256xf32>, vector<256x128xf32>, vector<16x128xf32> -> vector<16x128xf32>
    %c0_3 = arith.constant 0 : index
    %c0_4 = arith.constant 0 : index
    %3 = vector.load %arg3[%c0_3, %c0_4] : memref<1x128xf32, #tpu.memory_space<vmem>>, vector<1x128xf32>
    %4 = vector.broadcast %3 : vector<1x128xf32> to vector<16x128xf32>
    %5 = arith.addf %2, %4 : vector<16x128xf32>
    %c0_5 = arith.constant 0 : index
    %c0_6 = arith.constant 0 : index
    %6 = vector.load %arg4[%c0_5, %c0_6] : memref<16x128xf32, #tpu.memory_space<vmem>>, vector<16x128xf32>
    tpu.vector_store %arg4[%c0_5, %c0_6], %5 {strides = array<i32>} : memref<16x128xf32, #tpu.memory_space<vmem>>, vector<16x128xf32>,
    return
  }
  func.func @transform_0(%arg0: i32) -> (i32, i32) {
    %c0_i32 = arith.constant 0 : i32
    %c0_i32_0 = arith.constant 0 : i32
    return %arg0, %c0_i32 : i32, i32
  }
  func.func @transform_1(%arg0: i32) -> (i32, i32) {
    %c0_i32 = arith.constant 0 : i32
    %c0_i32_0 = arith.constant 0 : i32
    %c0_i32_1 = arith.constant 0 : i32
    return %c0_i32, %c0_i32_0 : i32, i32
  }
  func.func @transform_2(%arg0: i32) -> (i32, i32) {
    %c0_i32 = arith.constant 0 : i32
    %c0_i32_0 = arith.constant 0 : i32
    %c0_i32_1 = arith.constant 0 : i32
    return %c0_i32, %c0_i32_0 : i32, i32
  }
  func.func @transform_3(%arg0: i32) -> (i32, i32) {
    %c0_i32 = arith.constant 0 : i32
    %c0_i32_0 = arith.constant 0 : i32
    return %arg0, %c0_i32 : i32, i32
  }
}

</mosaic_0001>

<llo_original>
// kernel: tpu_custom_call.1
$region0: #{tpu_custom_call.1}
  #allocation0 [shape = 'u32[]', space=smem, size = 0x4, offset = 0x4, fixed_abs, tag = 'smem constant byte address 0x4 - core index']
  #allocation1 [shape = 'u32[144,128]{1,0:T(1,128)}', space=vmem, size = 0x12000, scoped, tag = 'internal scratch']
  %s0 = inlined_call_operand.hbm [shape: f32[16,256], index: 0, kind: input, shape index: {}]
  %s1 = inlined_call_operand.hbm [shape: f32[256,128], index: 1, kind: input, shape index: {}]
  %s2 = inlined_call_operand.vmem [shape: f32[1,128], index: 2, kind: input, shape index: {}]
  %s3 = inlined_call_operand.hbm [shape: f32[16,128], index: 3, kind: output, shape index: {}]
  %s4 = sld [smem:[#allocation0]]
  $region30: #{tpu_custom_call.1} parent=0
    _
  %s6 = ssub.s32 1, %s4
  %s7 = scalar_select 0, %s6, %s4
  $region1: #{tpu_custom_call.1} parent=0
    #allocation2 [shape = 'u8[16384]{0}', space=vmem, size = 0x4000, scoped, tag = 'input window, operand 0, single buffered']
    #allocation3 [shape = 's32[1]{0}', space=sflag, size = 0x4, scoped, tag = 'scoped memory for tpu_custom_call.1']
    #allocation4 [shape = 's32[1]{0}', space=sflag, size = 0x4, scoped, tag = 'scoped memory for tpu_custom_call.1']
    #allocation5 [shape = 'u8[131072]{0}', space=vmem, size = 0x20000, scoped, tag = 'input window, operand 1, single buffered']
    #allocation6 [shape = 's32[1]{0}', space=sflag, size = 0x4, scoped, tag = 'scoped memory for tpu_custom_call.1']
    #allocation7 [shape = 'u8[8192]{0}', space=vmem, size = 0x2000, scoped, tag = 'output window, operand 0, single buffered']
    %8 = vsyncpa [#allocation3], 0
    %9 = vsyncpa [#allocation6], 0
    %10 = vsyncpa [#allocation4], 0
    // Predicated region
    $region2: #{tpu_custom_call.1} parent=1 // pred_check
      _
    $region3: #{tpu_custom_call.1} parent=1 // pred_check_branch
      %12 = sbr.rel (0) target = $region5
    $region4: #{tpu_custom_call.1} parent=1 // pred_region
      %s14 = ssub.s32 512, 512
      %15 = vsyncadd [#allocation3], %s14
      %s16 = sshll.u32 [#allocation2], 4
      %s17 = int_to_ptr.vmem [resolvable:$true] %s16
      %22 = dma.hbm_to_vmem [thread:$0]  %s0, 512, %s17, [#allocation3], 256, 256, 16
    $region5: #{tpu_custom_call.1} parent=1 // pred_fallthru
      _
    // Predicated region
    $region6: #{tpu_custom_call.1} parent=1 // pred_check
      _
    $region7: #{tpu_custom_call.1} parent=1 // pred_check_branch
      %24 = sbr.rel (0) target = $region9
    $region8: #{tpu_custom_call.1} parent=1 // pred_region
      %s26 = ssub.s32 4096, 4096
      %27 = vsyncadd [#allocation6], %s26
      %s28 = sshll.u32 [#allocation5], 4
      %s29 = int_to_ptr.vmem [resolvable:$true] %s28
      %34 = dma.hbm_to_vmem [thread:$0]  %s1, 4096, %s29, [#allocation6], 128, 128, 8
    $region9: #{tpu_custom_call.1} parent=1 // pred_fallthru
      _
    // Predicated region
    $region10: #{tpu_custom_call.1} parent=1 // pred_check
      _
    $region11: #{tpu_custom_call.1} parent=1 // pred_check_branch
      %36 = sbr.rel (0) target = $region13
    $region12: #{tpu_custom_call.1} parent=1 // pred_region
      _
    $region13: #{tpu_custom_call.1} parent=1 // pred_fallthru
      _
    // Predicated region
    $region14: #{tpu_custom_call.1} parent=1 // pred_check
      _
    $region15: #{tpu_custom_call.1} parent=1 // pred_check_branch
      %38 = sbr.rel (0) target = $region17
    $region16: #{tpu_custom_call.1} parent=1 // pred_region
      %39 = dma.done [#allocation3], 512
    $region17: #{tpu_custom_call.1} parent=1 // pred_fallthru
      _
    // Predicated region
    $region18: #{tpu_custom_call.1} parent=1 // pred_check
      _
    $region19: #{tpu_custom_call.1} parent=1 // pred_check_branch
      %41 = sbr.rel (0) target = $region21
    $region20: #{tpu_custom_call.1} parent=1 // pred_region
      %42 = dma.done [#allocation6], 4096
    $region21: #{tpu_custom_call.1} parent=1 // pred_fallthru
      _
    %v43 = vld [vmem:[#allocation2] sm:$0xff]
    %v44 = vld [vmem:[#allocation2 + $0x8] sm:$0xff]
    %v45 = vld [vmem:[#allocation2 + $0x10] sm:$0xff]
    %v46 = vld [vmem:[#allocation2 + $0x18] sm:$0xff]
    %v47 = vld [vmem:[#allocation5] sm:$0xff]
    %v48 = vld [vmem:[#allocation5 + $0x8] sm:$0xff]
    %v49 = vld [vmem:[#allocation5 + $0x10] sm:$0xff]
    %v50 = vld [vmem:[#allocation5 + $0x18] sm:$0xff]
    %v51 = vld [vmem:[#allocation5 + $0x20] sm:$0xff]
    %v52 = vld [vmem:[#allocation5 + $0x28] sm:$0xff]
    %v53 = vld [vmem:[#allocation5 + $0x30] sm:$0xff]
    %v54 = vld [vmem:[#allocation5 + $0x38] sm:$0xff]
    %v55 = vld [vmem:[#allocation5 + $0x40] sm:$0xff]
    %v56 = vld [vmem:[#allocation5 + $0x48] sm:$0xff]
    %v57 = vld [vmem:[#allocation5 + $0x50] sm:$0xff]
    %v58 = vld [vmem:[#allocation5 + $0x58] sm:$0xff]
    %v59 = vld [vmem:[#allocation5 + $0x60] sm:$0xff]
    %v60 = vld [vmem:[#allocation5 + $0x68] sm:$0xff]
    %v61 = vld [vmem:[#allocation5 + $0x70] sm:$0xff]
    %v62 = vld [vmem:[#allocation5 + $0x78] sm:$0xff]
    %v63 = vld [vmem:[#allocation5 + $0x80] sm:$0xff]
    %v64 = vld [vmem:[#allocation5 + $0x88] sm:$0xff]
    %v65 = vld [vmem:[#allocation5 + $0x90] sm:$0xff]
    %v66 = vld [vmem:[#allocation5 + $0x98] sm:$0xff]
    %v67 = vld [vmem:[#allocation5 + $0xa0] sm:$0xff]
    %v68 = vld [vmem:[#allocation5 + $0xa8] sm:$0xff]
    %v69 = vld [vmem:[#allocation5 + $0xb0] sm:$0xff]
    %v70 = vld [vmem:[#allocation5 + $0xb8] sm:$0xff]
    %v71 = vld [vmem:[#allocation5 + $0xc0] sm:$0xff]
    %v72 = vld [vmem:[#allocation5 + $0xc8] sm:$0xff]
    %v73 = vld [vmem:[#allocation5 + $0xd0] sm:$0xff]
    %v74 = vld [vmem:[#allocation5 + $0xd8] sm:$0xff]
    %v75 = vld [vmem:[#allocation5 + $0xe0] sm:$0xff]
    %v76 = vld [vmem:[#allocation5 + $0xe8] sm:$0xff]
    %v77 = vld [vmem:[#allocation5 + $0xf0] sm:$0xff]
    %v78 = vld [vmem:[#allocation5 + $0xf8] sm:$0xff]
    %v79 = vld [vmem:[%s2] sm:$0x1]
    %v81 = vlaneseq
    %v82 = vshrl.u32 %v81, 7
    %v83 = vsub.s32 0, %v82
    %v84 = vrot.slane %v79, %v83
    %86 = vmatprep.subr.mxu0 0.0
    %87 = vmatpush1.msra.mxu0 %v47
    %88 = vmatprep.subr.mxu0 0.0
    %89 = vmatpush1.msra.mxu0 %v48
    %90 = vmatprep.subr.mxu0 0.0
    %91 = vmatpush1.msra.mxu0 %v49
    %92 = vmatprep.subr.mxu0 0.0
    %93 = vmatpush1.msra.mxu0 %v50
    %94 = vmatprep.subr.mxu0 0.0
    %95 = vmatpush1.msra.mxu0 %v51
    %96 = vmatprep.subr.mxu0 0.0
    %97 = vmatpush1.msra.mxu0 %v52
    %98 = vmatprep.subr.mxu0 0.0
    %99 = vmatpush1.msra.mxu0 %v53
    %100 = vmatprep.subr.mxu0 0.0
    %101 = vmatpush1.msra.mxu0 %v54
    %102 = vmatprep.subr.mxu0 0.0
    %103 = vmatpush1.msra.mxu0 %v55
    %104 = vmatprep.subr.mxu0 0.0
    %105 = vmatpush1.msra.mxu0 %v56
    %106 = vmatprep.subr.mxu0 0.0
    %107 = vmatpush1.msra.mxu0 %v57
    %108 = vmatprep.subr.mxu0 0.0
    %109 = vmatpush1.msra.mxu0 %v58
    %110 = vmatprep.subr.mxu0 0.0
    %111 = vmatpush1.msra.mxu0 %v59
    %112 = vmatprep.subr.mxu0 0.0
    %113 = vmatpush1.msra.mxu0 %v60
    %114 = vmatprep.subr.mxu0 0.0
    %115 = vmatpush1.msra.mxu0 %v61
    %116 = vmatprep.subr.mxu0 0.0
    %117 = vmatpush1.msra.mxu0 %v62
    %118 = vmatprep.subr.mxu0 0.0
    %119 = vmatpush1.msra.mxu0 %v63
    %120 = vmatprep.subr.mxu0 0.0
    %121 = vmatpush1.msra.mxu0 %v64
    %122 = vmatprep.subr.mxu0 0.0
    %123 = vmatpush1.msra.mxu0 %v65
    %124 = vmatprep.subr.mxu0 0.0
    %125 = vmatpush1.msra.mxu0 %v66
    %126 = vmatprep.subr.mxu0 0.0
    %127 = vmatpush1.msra.mxu0 %v67
    %128 = vmatprep.subr.mxu0 0.0
    %129 = vmatpush1.msra.mxu0 %v68
    %130 = vmatprep.subr.mxu0 0.0
    %131 = vmatpush1.msra.mxu0 %v69
    %132 = vmatprep.subr.mxu0 0.0
    %133 = vmatpush1.msra.mxu0 %v70
    %134 = vmatprep.subr.mxu0 0.0
    %135 = vmatpush1.msra.mxu0 %v71
    %136 = vmatprep.subr.mxu0 0.0
    %137 = vmatpush1.msra.mxu0 %v72
    %138 = vmatprep.subr.mxu0 0.0
    %139 = vmatpush1.msra.mxu0 %v73
    %140 = vmatprep.subr.mxu0 0.0
    %141 = vmatpush1.msra.mxu0 %v74
    %142 = vmatprep.subr.mxu0 0.0
    %143 = vmatpush1.msra.mxu0 %v75
    %144 = vmatprep.subr.mxu0 0.0
    %145 = vmatpush1.msra.mxu0 %v76
    %146 = vmatprep.subr.mxu0 0.0
    %147 = vmatpush1.msra.mxu0 %v77
    %148 = vmatprep.subr.mxu0 0.0
    %149 = vmatpush1.msra.mxu0 %v78
    %150 = vmatprep.mubr.f32.mxu0 %v44
    %151 = vmatmul.mubr.f32.gmra.mrb[0].mxu0 %v43
    %v152 = vpop.f32.mrb[0].mxu0
    %v153 = vadd.f32 %v84, %v152
    %v154 = vpop.f32.mrb[0].mxu0
    %155 = vmatprep.mubr.f32.mxu0 %v46
    %156 = vmatmul.mubr.f32.gmra.mrb[0].mxu0 %v45
    %v157 = vpop.f32.mrb[0].mxu0
    %v158 = vadd.f32 %v84, %v157
    %v159 = vpop.f32.mrb[0].mxu0
    %160 = vdwg.mxu0
    %161 = vst [vmem:[#allocation7] sm:$0xff] %v153
    %162 = vst [vmem:[#allocation7 + $0x8] sm:$0xff] %v158
    // Predicated region
    $region22: #{tpu_custom_call.1} parent=1 // pred_check
      _
    $region23: #{tpu_custom_call.1} parent=1 // pred_check_branch
      %164 = sbr.rel (0) target = $region25
    $region24: #{tpu_custom_call.1} parent=1 // pred_region
      %s166 = ssub.s32 256, 256
      %167 = vsyncadd [#allocation4], %s166
      %s168 = sshll.u32 [#allocation7], 4
      %s169 = int_to_ptr.vmem [resolvable:$true] %s168
      %174 = dma.vmem_to_hbm [thread:$0]  %s169, 256, %s3, [#allocation4], 128, 128, 8
    $region25: #{tpu_custom_call.1} parent=1 // pred_fallthru
      _
    // Predicated region
    $region26: #{tpu_custom_call.1} parent=1 // pred_check
      _
    $region27: #{tpu_custom_call.1} parent=1 // pred_check_branch
      %176 = sbr.rel (0) target = $region29
    $region28: #{tpu_custom_call.1} parent=1 // pred_region
      %177 = dma.done [#allocation4], 256
    $region29: #{tpu_custom_call.1} parent=1 // pred_fallthru
      _
    %178 = vsyncpa [#allocation3], 1
    %179 = vsyncpa [#allocation6], 1
    %180 = vsyncpa [#allocation4], 1

</llo_original>
